<compile_context>
chip_gen: v5e
topology: v5e:2x2
jax: 0.10.0
libtpu: 0.0.40
codegen_flags: <defaults>
</compile_context>

<pallas_src>
import jax
import jax.numpy as jnp
from jax.experimental import pallas as pl
from jax.experimental.pallas import tpu as pltpu

IN_DIM = 512
HID_DIM = 128
OUT_DIM = 28

# SELU constants (match torch.nn.functional.selu)
_SELU_ALPHA = 1.6732632423543772
_SELU_SCALE = 1.0507009873554805


def _round_up(n, m):
    return ((n + m - 1) // m) * m


def mlp_classifier_kernel(x_ref, w1_ref, b1_ref, w2_ref, b2_ref, o_ref):
    # fc1: (TB, 512) @ (512, 128) -> f32 accumulate, + (1, 128) bias (f32).
    h = jnp.dot(x_ref[...], w1_ref[...], preferred_element_type=jnp.float32)
    h = h + b1_ref[...]
    # SELU in f32: scale * (x if x > 0 else alpha * (exp(x) - 1)).
    # min() before exp avoids overflow; exp lands on the EUP slot (free under the
    # DMA-bound loop).  Kept f32 even on the bf16 path (v5e has no bf16 VPU/EUP).
    neg = _SELU_ALPHA * (jnp.exp(jnp.minimum(h, 0.0)) - 1.0)
    h = _SELU_SCALE * jnp.where(h > 0.0, h, neg)
    # fc2: (TB, 128) @ (128, 28) -> f32, + bias.  h is cast to w2's dtype so the
    # bf16 path uses the MXU-native dtype; for f32 weights the cast is a no-op.
    out = jnp.dot(h.astype(w2_ref.dtype), w2_ref[...], preferred_element_type=jnp.float32)
    out = out + b2_ref[...]
    o_ref[...] = out.astype(o_ref.dtype)


def mlp_classifier(x, w1, b1, w2, b2, *, tb=2048, matmul_dtype=None):
    """x: (B, 512). w1: (512, 128). b1: (128,). w2: (128, 28). b2: (28,).

    matmul_dtype: optionally jnp.bfloat16 to halve the dominant x HBM stream;
    biases, accumulation and SELU stay in float32.
    """
    B = x.shape[0]

    if matmul_dtype is not None:
        x = x.astype(matmul_dtype)
        w1 = w1.astype(matmul_dtype)
        w2 = w2.astype(matmul_dtype)

    # Biases as (1, N) f32 rows (cheap metadata reshape; no zero-padding needed
    # now that the output is the natural 28-wide array).
    b1_2d = b1.reshape(1, HID_DIM).astype(jnp.float32)
    b2_2d = b2.reshape(1, OUT_DIM).astype(jnp.float32)

    # Sublane alignment for the batch-tiled blocks: 8 rows for f32, 16 for bf16.
    sub = max(8, 32 // jnp.dtype(x.dtype).itemsize)
    # Batch tile: capped at tb; for larger B also capped at ~B/2 so the grid has
    # >= 2 steps and the "parallel" axis can shard across both TCs on v7x.
    TB = min(_round_up(tb, sub), max(sub, _round_up(pl.cdiv(B, 2), sub)))
    grid = (pl.cdiv(B, TB),)  # ragged last block handled by Pallas; no jnp.pad.

    # VMEM budget: double-buffered x/out tiles + resident weights + slack.
    x_item = jnp.dtype(x.dtype).itemsize
    w_item = jnp.dtype(w1.dtype).itemsize
    out_lanes = _round_up(OUT_DIM, 128)  # 28-wide out tile still occupies 128 lanes in VMEM
    vmem_bytes = (
        2 * TB * IN_DIM * x_item
        + 2 * TB * out_lanes * 4
        + 2 * (IN_DIM * HID_DIM * w_item + HID_DIM * out_lanes * w_item
               + HID_DIM * 4 + out_lanes * 4)
        + (4 << 20)  # slack for compiler-internal scratch
    )
    vmem_limit = int(max(vmem_bytes, 16 << 20))  # >= v5e's scoped default; << v7x's 64 MiB

    out = pl.pallas_call(
        mlp_classifier_kernel,
        out_shape=jax.ShapeDtypeStruct((B, OUT_DIM), jnp.float32),
        grid_spec=pltpu.PrefetchScalarGridSpec(
            num_scalar_prefetch=0,
            grid=grid,
            in_specs=[
                pl.BlockSpec((TB, IN_DIM), lambda i: (i, 0)),        # x: tiled on batch
                pl.BlockSpec((IN_DIM, HID_DIM), lambda i: (0, 0)),   # w1: resident
                pl.BlockSpec((1, HID_DIM), lambda i: (0, 0)),        # b1: resident
                pl.BlockSpec((HID_DIM, OUT_DIM), lambda i: (0, 0)),  # w2: resident
                pl.BlockSpec((1, OUT_DIM), lambda i: (0, 0)),        # b2: resident
            ],
            out_specs=pl.BlockSpec((TB, OUT_DIM), lambda i: (i, 0)),
        ),
        compiler_params=pltpu.CompilerParams(
            dimension_semantics=("parallel",),   # shard batch steps across TCs on v7x
            vmem_limit_bytes=vmem_limit,
        ),
    )(x, w1, b1_2d, w2, b2_2d)
    return out


def init_params(key):
    """Deterministic parameter init mirroring nn.Linear's shapes."""
    k1, k2, k3, k4 = jax.random.split(key, 4)
    # nn.Linear default init: uniform(-1/sqrt(fan_in), 1/sqrt(fan_in))
    bound1 = 1.0 / jnp.sqrt(IN_DIM)
    bound2 = 1.0 / jnp.sqrt(HID_DIM)
    # Stored as (in, out) — transpose of PyTorch's (out, in) storage.
    w1 = jax.random.uniform(k1, (IN_DIM, HID_DIM), jnp.float32, -bound1, bound1)
    b1 = jax.random.uniform(k2, (HID_DIM,), jnp.float32, -bound1, bound1)
    w2 = jax.random.uniform(k3, (HID_DIM, OUT_DIM), jnp.float32, -bound2, bound2)
    b2 = jax.random.uniform(k4, (OUT_DIM,), jnp.float32, -bound2, bound2)
    return w1, b1, w2, b2


def reference(x, w1, b1, w2, b2):
    h = x @ w1 + b1
    h = _SELU_SCALE * jnp.where(h > 0, h, _SELU_ALPHA * (jnp.exp(h) - 1.0))
    return h @ w2 + b2


if __name__ == "__main__":
    key = jax.random.PRNGKey(0)
    kx, kp, kx2, kx3, kx4 = jax.random.split(key, 5)
    w1, b1, w2, b2 = init_params(kp)

    # Small test (single grid step).
    B = 8
    x = jax.random.normal(kx, (B, IN_DIM), jnp.float32)
    out = jax.block_until_ready(mlp_classifier(x, w1, b1, w2, b2))
    ref = reference(x, w1, b1, w2, b2)
    assert out.shape == (B, OUT_DIM)
    assert jnp.allclose(out, ref, atol=1e-4, rtol=1e-4)

    # Ragged batch, 2 grid steps, no wrapper-side padding.
    B2 = 600
    x2 = jax.random.normal(kx2, (B2, IN_DIM), jnp.float32)
    out2 = jax.block_until_ready(mlp_classifier(x2, w1, b1, w2, b2))
    ref2 = reference(x2, w1, b1, w2, b2)
    assert out2.shape == (B2, OUT_DIM)
    assert jnp.allclose(out2, ref2, atol=1e-4, rtol=1e-4)

    # Larger ragged batch exercising the default TB=2048 tile (3 grid steps).
    B3 = 4200
    x3 = jax.random.normal(kx3, (B3, IN_DIM), jnp.float32)
    out3 = jax.block_until_ready(mlp_classifier(x3, w1, b1, w2, b2))
    ref3 = reference(x3, w1, b1, w2, b2)
    assert out3.shape == (B3, OUT_DIM)
    assert jnp.allclose(out3, ref3, atol=1e-4, rtol=1e-4)

    # Optional bf16 matmul path (f32 accumulation + SELU); looser tolerance.
    B4 = 64
    x4 = jax.random.normal(kx4, (B4, IN_DIM), jnp.float32)
    out4 = jax.block_until_ready(
        mlp_classifier(x4, w1, b1, w2, b2, matmul_dtype=jnp.bfloat16))
    ref4 = reference(x4, w1, b1, w2, b2)
    assert out4.shape == (B4, OUT_DIM)
    assert jnp.allclose(out4, ref4, atol=5e-2, rtol=5e-2)

    print("KERNEL_OK")
</pallas_src>

<mosaic_0001>
module attributes {stable_mosaic.version = 11 : i64} {
  func.func @mlp_classifier_kernel(%arg0: i32, %arg1: memref<8x512xf32, #tpu.memory_space<vmem>>, %arg2: memref<512x128xf32, #tpu.memory_space<vmem>>, %arg3: memref<1x128xf32, #tpu.memory_space<vmem>>, %arg4: memref<128x28xf32, #tpu.memory_space<vmem>>, %arg5: memref<1x28xf32, #tpu.memory_space<vmem>>, %arg6: memref<8x28xf32, #tpu.memory_space<vmem>>) attributes {dimension_semantics = [#tpu.dimension_semantics<parallel>], iteration_bounds = array<i64: 1>, scalar_prefetch = 0 : i64, scratch_operands = 0 : i64, tpu.core_type = #tpu.core_type<tc>, window_params = [{transform_indices = @transform_0, window_bounds = array<i64: 8, 512>}, {pipeline_mode = #tpu.pipeline_mode<synchronous>, transform_indices = @transform_1, window_bounds = array<i64: 512, 128>}, {pipeline_mode = #tpu.pipeline_mode<synchronous>, transform_indices = @transform_2, window_bounds = array<i64: 1, 128>}, {pipeline_mode = #tpu.pipeline_mode<synchronous>, transform_indices = @transform_3, window_bounds = array<i64: 128, 28>}, {pipeline_mode = #tpu.pipeline_mode<synchronous>, transform_indices = @transform_4, window_bounds = array<i64: 1, 28>}, {transform_indices = @transform_5, window_bounds = array<i64: 8, 28>}]} {
    %c0 = arith.constant 0 : index
    %c0_0 = arith.constant 0 : index
    %0 = vector.load %arg1[%c0, %c0_0] : memref<8x512xf32, #tpu.memory_space<vmem>>, vector<8x512xf32>
    %c0_1 = arith.constant 0 : index
    %c0_2 = arith.constant 0 : index
    %1 = vector.load %arg2[%c0_1, %c0_2] : memref<512x128xf32, #tpu.memory_space<vmem>>, vector<512x128xf32>
    %cst = arith.constant dense<0.000000e+00> : vector<8x128xf32>
    %2 = tpu.matmul %0, %1, %cst {dimension_numbers = #tpu.dot_dimension_numbers<[1], [0], [0], [1], [0, 0, 1, 1], [], []>} : vector<8x512xf32>, vector<512x128xf32>, vector<8x128xf32> -> vector<8x128xf32>
    %c0_3 = arith.constant 0 : index
    %c0_4 = arith.constant 0 : index
    %3 = vector.load %arg3[%c0_3, %c0_4] : memref<1x128xf32, #tpu.memory_space<vmem>>, vector<1x128xf32>
    %4 = vector.broadcast %3 : vector<1x128xf32> to vector<8x128xf32>
    %5 = arith.addf %2, %4 : vector<8x128xf32>
    %cst_5 = arith.constant 0.000000e+00 : f32
    %6 = vector.broadcast %cst_5 : f32 to vector<8x128xf32>
    %7 = arith.minimumf %5, %6 : vector<8x128xf32>
    %8 = math.exp %7 : vector<8x128xf32>
    %cst_6 = arith.constant 1.000000e+00 : f32
    %9 = vector.broadcast %cst_6 : f32 to vector<8x128xf32>
    %10 = arith.subf %8, %9 : vector<8x128xf32>
    %cst_7 = arith.constant 1.67326319 : f32
    %11 = vector.broadcast %cst_7 : f32 to vector<8x128xf32>
    %12 = arith.mulf %11, %10 : vector<8x128xf32>
    %cst_8 = arith.constant 0.000000e+00 : f32
    %13 = vector.broadcast %cst_8 : f32 to vector<8x128xf32>
    %14 = arith.cmpf ogt, %5, %13 : vector<8x128xf32>
    %15 = arith.select %14, %5, %12 : vector<8x128xi1>, vector<8x128xf32>
    %cst_9 = arith.constant 1.05070102 : f32
    %16 = vector.broadcast %cst_9 : f32 to vector<8x128xf32>
    %17 = arith.mulf %16, %15 : vector<8x128xf32>
    %c0_10 = arith.constant 0 : index
    %c0_11 = arith.constant 0 : index
    %18 = vector.load %arg4[%c0_10, %c0_11] : memref<128x28xf32, #tpu.memory_space<vmem>>, vector<128x28xf32>
    %cst_12 = arith.constant dense<0.000000e+00> : vector<8x28xf32>
    %19 = tpu.matmul %17, %18, %cst_12 {dimension_numbers = #tpu.dot_dimension_numbers<[1], [0], [0], [1], [0, 0, 1, 1], [], []>} : vector<8x128xf32>, vector<128x28xf32>, vector<8x28xf32> -> vector<8x28xf32>
    %c0_13 = arith.constant 0 : index
    %c0_14 = arith.constant 0 : index
    %20 = vector.load %arg5[%c0_13, %c0_14] : memref<1x28xf32, #tpu.memory_space<vmem>>, vector<1x28xf32>
    %21 = vector.broadcast %20 : vector<1x28xf32> to vector<8x28xf32>
    %22 = arith.addf %19, %21 : vector<8x28xf32>
    %c0_15 = arith.constant 0 : index
    %c0_16 = arith.constant 0 : index
    %23 = vector.load %arg6[%c0_15, %c0_16] : memref<8x28xf32, #tpu.memory_space<vmem>>, vector<8x28xf32>
    tpu.vector_store %arg6[%c0_15, %c0_16], %22 {strides = array<i32>} : memref<8x28xf32, #tpu.memory_space<vmem>>, vector<8x28xf32>,
    return
  }
  func.func @transform_0(%arg0: i32) -> (i32, i32) {
    %c0_i32 = arith.constant 0 : i32
    %c0_i32_0 = arith.constant 0 : i32
    return %arg0, %c0_i32 : i32, i32
  }
  func.func @transform_1(%arg0: i32) -> (i32, i32) {
    %c0_i32 = arith.constant 0 : i32
    %c0_i32_0 = arith.constant 0 : i32
    %c0_i32_1 = arith.constant 0 : i32
    return %c0_i32, %c0_i32_0 : i32, i32
  }
  func.func @transform_2(%arg0: i32) -> (i32, i32) {
    %c0_i32 = arith.constant 0 : i32
    %c0_i32_0 = arith.constant 0 : i32
    %c0_i32_1 = arith.constant 0 : i32
    return %c0_i32, %c0_i32_0 : i32, i32
  }
  func.func @transform_3(%arg0: i32) -> (i32, i32) {
    %c0_i32 = arith.constant 0 : i32
    %c0_i32_0 = arith.constant 0 : i32
    %c0_i32_1 = arith.constant 0 : i32
    return %c0_i32, %c0_i32_0 : i32, i32
  }
  func.func @transform_4(%arg0: i32) -> (i32, i32) {
    %c0_i32 = arith.constant 0 : i32
    %c0_i32_0 = arith.constant 0 : i32
    %c0_i32_1 = arith.constant 0 : i32
    return %c0_i32, %c0_i32_0 : i32, i32
  }
  func.func @transform_5(%arg0: i32) -> (i32, i32) {
    %c0_i32 = arith.constant 0 : i32
    %c0_i32_0 = arith.constant 0 : i32
    return %arg0, %c0_i32 : i32, i32
  }
}

</mosaic_0001>

<llo_original>
// kernel: tpu_custom_call.1
$region0: #{tpu_custom_call.1}
  #allocation0 [shape = 'u32[]', space=smem, size = 0x4, offset = 0x4, fixed_abs, tag = 'smem constant byte address 0x4 - core index']
  #allocation1 [shape = 'u32[72,128]{1,0:T(1,128)}', space=vmem, size = 0x9000, scoped, tag = 'internal scratch']
  %s0 = inlined_call_operand.vmem [shape: f32[8,512], index: 0, kind: input, shape index: {}]
  %s1 = inlined_call_operand.hbm [shape: f32[512,128], index: 1, kind: input, shape index: {}]
  %s2 = inlined_call_operand.vmem [shape: f32[1,128], index: 2, kind: input, shape index: {}]
  %s3 = inlined_call_operand.vmem [shape: f32[128,28], index: 3, kind: input, shape index: {}]
  %s4 = inlined_call_operand.vmem [shape: f32[1,28], index: 4, kind: input, shape index: {}]
  %s5 = inlined_call_operand.hbm [shape: f32[8,28], index: 5, kind: output, shape index: {}]
  %s6 = sld [smem:[#allocation0]]
  $region34: #{tpu_custom_call.1} parent=0
    _
  %s8 = ssub.s32 1, %s6
  %s9 = scalar_select 0, %s8, %s6
  $region1: #{tpu_custom_call.1} parent=0
    #allocation2 [shape = 'u8[262144]{0}', space=vmem, size = 0x40000, scoped, tag = 'input window, operand 1, single buffered']
    #allocation3 [shape = 's32[1]{0}', space=sflag, size = 0x4, scoped, tag = 'scoped memory for tpu_custom_call.1']
    #allocation4 [shape = 's32[1]{0}', space=sflag, size = 0x4, scoped, tag = 'scoped memory for tpu_custom_call.1']
    #allocation5 [shape = 'u8[4096]{0}', space=vmem, size = 0x1000, scoped, tag = 'output window, operand 0, single buffered']
    %10 = vsyncpa [#allocation3], 0
    %11 = vsyncpa [#allocation4], 0
    // Predicated region
    $region2: #{tpu_custom_call.1} parent=1 // pred_check
      _
    $region3: #{tpu_custom_call.1} parent=1 // pred_check_branch
      %13 = sbr.rel (0) target = $region5
    $region4: #{tpu_custom_call.1} parent=1 // pred_region
      _
    $region5: #{tpu_custom_call.1} parent=1 // pred_fallthru
      _
    // Predicated region
    $region6: #{tpu_custom_call.1} parent=1 // pred_check
      _
    $region7: #{tpu_custom_call.1} parent=1 // pred_check_branch
      %15 = sbr.rel (0) target = $region9
    $region8: #{tpu_custom_call.1} parent=1 // pred_region
      %17 = vsyncadd [#allocation3], 0
      %s18 = sshll.u32 %s1, 4
      %s19 = int_to_ptr.hbm [resolvable:$true] %s18
      %s20 = sshll.u32 [#allocation2], 4
      %s21 = int_to_ptr.vmem [resolvable:$true] %s20
      %26 = dma.hbm_to_vmem [thread:$0]  %s19, 8192, %s21, [#allocation3], 128, 128, 8
    $region9: #{tpu_custom_call.1} parent=1 // pred_fallthru
      _
    // Predicated region
    $region10: #{tpu_custom_call.1} parent=1 // pred_check
      _
    $region11: #{tpu_custom_call.1} parent=1 // pred_check_branch
      %28 = sbr.rel (0) target = $region13
    $region12: #{tpu_custom_call.1} parent=1 // pred_region
      _
    $region13: #{tpu_custom_call.1} parent=1 // pred_fallthru
      _
    // Predicated region
    $region14: #{tpu_custom_call.1} parent=1 // pred_check
      _
    $region15: #{tpu_custom_call.1} parent=1 // pred_check_branch
      %30 = sbr.rel (0) target = $region17
    $region16: #{tpu_custom_call.1} parent=1 // pred_region
      _
    $region17: #{tpu_custom_call.1} parent=1 // pred_fallthru
      _
    // Predicated region
    $region18: #{tpu_custom_call.1} parent=1 // pred_check
      _
    $region19: #{tpu_custom_call.1} parent=1 // pred_check_branch
      %32 = sbr.rel (0) target = $region21
    $region20: #{tpu_custom_call.1} parent=1 // pred_region
      _
    $region21: #{tpu_custom_call.1} parent=1 // pred_fallthru
      _
    // Predicated region
    $region22: #{tpu_custom_call.1} parent=1 // pred_check
      _
    $region23: #{tpu_custom_call.1} parent=1 // pred_check_branch
      %34 = sbr.rel (0) target = $region25
    $region24: #{tpu_custom_call.1} parent=1 // pred_region
      %36 = dma.done [#allocation3], 8192
    $region25: #{tpu_custom_call.1} parent=1 // pred_fallthru
      _
    %v37 = vld [vmem:[%s0] sm:$0xff]
    %v38 = vld [vmem:[%s0 + $0x8] sm:$0xff]
    %v39 = vld [vmem:[%s0 + $0x10] sm:$0xff]
    %v40 = vld [vmem:[%s0 + $0x18] sm:$0xff]
    %v41 = vld [vmem:[#allocation2] sm:$0xff]
    %v42 = vld [vmem:[#allocation2 + $0x8] sm:$0xff]
    %v43 = vld [vmem:[#allocation2 + $0x10] sm:$0xff]
    %v44 = vld [vmem:[#allocation2 + $0x18] sm:$0xff]
    %v45 = vld [vmem:[#allocation2 + $0x20] sm:$0xff]
    %v46 = vld [vmem:[#allocation2 + $0x28] sm:$0xff]
    %v47 = vld [vmem:[#allocation2 + $0x30] sm:$0xff]
    %v48 = vld [vmem:[#allocation2 + $0x38] sm:$0xff]
    %v49 = vld [vmem:[#allocation2 + $0x40] sm:$0xff]
    %v50 = vld [vmem:[#allocation2 + $0x48] sm:$0xff]
    %v51 = vld [vmem:[#allocation2 + $0x50] sm:$0xff]
    %v52 = vld [vmem:[#allocation2 + $0x58] sm:$0xff]
    %v53 = vld [vmem:[#allocation2 + $0x60] sm:$0xff]
    %v54 = vld [vmem:[#allocation2 + $0x68] sm:$0xff]
    %v55 = vld [vmem:[#allocation2 + $0x70] sm:$0xff]
    %v56 = vld [vmem:[#allocation2 + $0x78] sm:$0xff]
    %v57 = vld [vmem:[#allocation2 + $0x80] sm:$0xff]
    %v58 = vld [vmem:[#allocation2 + $0x88] sm:$0xff]
    %v59 = vld [vmem:[#allocation2 + $0x90] sm:$0xff]
    %v60 = vld [vmem:[#allocation2 + $0x98] sm:$0xff]
    %v61 = vld [vmem:[#allocation2 + $0xa0] sm:$0xff]
    %v62 = vld [vmem:[#allocation2 + $0xa8] sm:$0xff]
    %v63 = vld [vmem:[#allocation2 + $0xb0] sm:$0xff]
    %v64 = vld [vmem:[#allocation2 + $0xb8] sm:$0xff]
    %v65 = vld [vmem:[#allocation2 + $0xc0] sm:$0xff]
    %v66 = vld [vmem:[#allocation2 + $0xc8] sm:$0xff]
    %v67 = vld [vmem:[#allocation2 + $0xd0] sm:$0xff]
    %v68 = vld [vmem:[#allocation2 + $0xd8] sm:$0xff]
    %v69 = vld [vmem:[#allocation2 + $0xe0] sm:$0xff]
    %v70 = vld [vmem:[#allocation2 + $0xe8] sm:$0xff]
    %v71 = vld [vmem:[#allocation2 + $0xf0] sm:$0xff]
    %v72 = vld [vmem:[#allocation2 + $0xf8] sm:$0xff]
    %v73 = vld [vmem:[#allocation2 + $0x100] sm:$0xff]
    %v74 = vld [vmem:[#allocation2 + $0x108] sm:$0xff]
    %v75 = vld [vmem:[#allocation2 + $0x110] sm:$0xff]
    %v76 = vld [vmem:[#allocation2 + $0x118] sm:$0xff]
    %v77 = vld [vmem:[#allocation2 + $0x120] sm:$0xff]
    %v78 = vld [vmem:[#allocation2 + $0x128] sm:$0xff]
    %v79 = vld [vmem:[#allocation2 + $0x130] sm:$0xff]
    %v80 = vld [vmem:[#allocation2 + $0x138] sm:$0xff]
    %v81 = vld [vmem:[#allocation2 + $0x140] sm:$0xff]
    %v82 = vld [vmem:[#allocation2 + $0x148] sm:$0xff]
    %v83 = vld [vmem:[#allocation2 + $0x150] sm:$0xff]
    %v84 = vld [vmem:[#allocation2 + $0x158] sm:$0xff]
    %v85 = vld [vmem:[#allocation2 + $0x160] sm:$0xff]
    %v86 = vld [vmem:[#allocation2 + $0x168] sm:$0xff]
    %v87 = vld [vmem:[#allocation2 + $0x170] sm:$0xff]
    %v88 = vld [vmem:[#allocation2 + $0x178] sm:$0xff]
    %v89 = vld [vmem:[#allocation2 + $0x180] sm:$0xff]
    %v90 = vld [vmem:[#allocation2 + $0x188] sm:$0xff]
    %v91 = vld [vmem:[#allocation2 + $0x190] sm:$0xff]
    %v92 = vld [vmem:[#allocation2 + $0x198] sm:$0xff]
    %v93 = vld [vmem:[#allocation2 + $0x1a0] sm:$0xff]
    %v94 = vld [vmem:[#allocation2 + $0x1a8] sm:$0xff]
    %v95 = vld [vmem:[#allocation2 + $0x1b0] sm:$0xff]
    %v96 = vld [vmem:[#allocation2 + $0x1b8] sm:$0xff]
    %v97 = vld [vmem:[#allocation2 + $0x1c0] sm:$0xff]
    %v98 = vld [vmem:[#allocation2 + $0x1c8] sm:$0xff]
    %v99 = vld [vmem:[#allocation2 + $0x1d0] sm:$0xff]
    %v100 = vld [vmem:[#allocation2 + $0x1d8] sm:$0xff]
    %v101 = vld [vmem:[#allocation2 + $0x1e0] sm:$0xff]
    %v102 = vld [vmem:[#allocation2 + $0x1e8] sm:$0xff]
    %v103 = vld [vmem:[#allocation2 + $0x1f0] sm:$0xff]
    %v104 = vld [vmem:[#allocation2 + $0x1f8] sm:$0xff]
    %v105 = vld [vmem:[%s2] sm:$0x1]
    %v107 = vperm.slane %v105, 0
    %109 = vmatpush.msra.mxu0 %v56
    %110 = vmatpush.msra.mxu0 %v55
    %111 = vmatpush.msra.mxu0 %v54
    %112 = vmatpush.msra.mxu0 %v53
    %113 = vmatpush.msra.mxu0 %v52
    %114 = vmatpush.msra.mxu0 %v51
    %115 = vmatpush.msra.mxu0 %v50
    %116 = vmatpush.msra.mxu0 %v49
    %117 = vmatpush.msra.mxu0 %v48
    %118 = vmatpush.msra.mxu0 %v47
    %119 = vmatpush.msra.mxu0 %v46
    %120 = vmatpush.msra.mxu0 %v45
    %121 = vmatpush.msra.mxu0 %v44
    %122 = vmatpush.msra.mxu0 %v43
    %123 = vmatpush.msra.mxu0 %v42
    %124 = vmatpush.msra.mxu0 %v41
    %125 = vmatmul.f32.gmra.mxu0 %v37
    %v126 = vpop.f32.mrf.mxu0
    %v127 = vadd.f32 %v107, %v126
    %128 = vdwg.mxu0
    %129 = vmatpush.msra.mxu0 %v72
    %130 = vmatpush.msra.mxu0 %v71
    %131 = vmatpush.msra.mxu0 %v70
    %132 = vmatpush.msra.mxu0 %v69
    %133 = vmatpush.msra.mxu0 %v68
    %134 = vmatpush.msra.mxu0 %v67
    %135 = vmatpush.msra.mxu0 %v66
    %136 = vmatpush.msra.mxu0 %v65
    %137 = vmatpush.msra.mxu0 %v64
    %138 = vmatpush.msra.mxu0 %v63
    %139 = vmatpush.msra.mxu0 %v62
    %140 = vmatpush.msra.mxu0 %v61
    %141 = vmatpush.msra.mxu0 %v60
    %142 = vmatpush.msra.mxu0 %v59
    %143 = vmatpush.msra.mxu0 %v58
    %144 = vmatpush.msra.mxu0 %v57
    %145 = vmatmul.f32.gmra.mxu0 %v38
    %v146 = vpop.f32.mrf.mxu0
    %v147 = vadd.f32 %v127, %v146
    %148 = vdwg.mxu0
    %149 = vmatpush.msra.mxu0 %v88
    %150 = vmatpush.msra.mxu0 %v87
    %151 = vmatpush.msra.mxu0 %v86
    %152 = vmatpush.msra.mxu0 %v85
    %153 = vmatpush.msra.mxu0 %v84
    %154 = vmatpush.msra.mxu0 %v83
    %155 = vmatpush.msra.mxu0 %v82
    %156 = vmatpush.msra.mxu0 %v81
    %157 = vmatpush.msra.mxu0 %v80
    %158 = vmatpush.msra.mxu0 %v79
    %159 = vmatpush.msra.mxu0 %v78
    %160 = vmatpush.msra.mxu0 %v77
    %161 = vmatpush.msra.mxu0 %v76
    %162 = vmatpush.msra.mxu0 %v75
    %163 = vmatpush.msra.mxu0 %v74
    %164 = vmatpush.msra.mxu0 %v73
    %165 = vmatmul.f32.gmra.mxu0 %v39
    %v166 = vpop.f32.mrf.mxu0
    %v167 = vadd.f32 %v147, %v166
    %168 = vdwg.mxu0
    %169 = vmatpush.msra.mxu0 %v104
    %170 = vmatpush.msra.mxu0 %v103
    %171 = vmatpush.msra.mxu0 %v102
    %172 = vmatpush.msra.mxu0 %v101
    %173 = vmatpush.msra.mxu0 %v100
    %174 = vmatpush.msra.mxu0 %v99
    %175 = vmatpush.msra.mxu0 %v98
    %176 = vmatpush.msra.mxu0 %v97
    %177 = vmatpush.msra.mxu0 %v96
    %178 = vmatpush.msra.mxu0 %v95
    %179 = vmatpush.msra.mxu0 %v94
    %180 = vmatpush.msra.mxu0 %v93
    %181 = vmatpush.msra.mxu0 %v92
    %182 = vmatpush.msra.mxu0 %v91
    %183 = vmatpush.msra.mxu0 %v90
    %184 = vmatpush.msra.mxu0 %v89
    %185 = vmatmul.f32.gmra.mxu0 %v40
    %v186 = vpop.f32.mrf.mxu0
    %v187 = vadd.f32 %v167, %v186
    %188 = vdwg.mxu0
    %v189 = vmin.f32 %v187, 0.0
    %v190 = vmul.f32 %v189, 1.442695
    %v191 = vpow.pop %v190
    %v192 = vsub.f32 %v191, 1.0
    %v193 = vmul.f32 %v192, 1.6732632
    %vm194 = vcmp.gt.f32.partialorder %v187, 0.0
    %v195 = vsel %vm194, %v187, %v193
    %v196 = vmul.f32 %v195, 1.050701
    %v197 = vld [vmem:[%s3] sm:$0xff]
    %v198 = vld [vmem:[%s3 + $0x8] sm:$0xff]
    %v199 = vld [vmem:[%s3 + $0x10] sm:$0xff]
    %v200 = vld [vmem:[%s3 + $0x18] sm:$0xff]
    %v201 = vld [vmem:[%s3 + $0x20] sm:$0xff]
    %v202 = vld [vmem:[%s3 + $0x28] sm:$0xff]
    %v203 = vld [vmem:[%s3 + $0x30] sm:$0xff]
    %v204 = vld [vmem:[%s3 + $0x38] sm:$0xff]
    %v205 = vld [vmem:[%s3 + $0x40] sm:$0xff]
    %v206 = vld [vmem:[%s3 + $0x48] sm:$0xff]
    %v207 = vld [vmem:[%s3 + $0x50] sm:$0xff]
    %v208 = vld [vmem:[%s3 + $0x58] sm:$0xff]
    %v209 = vld [vmem:[%s3 + $0x60] sm:$0xff]
    %v210 = vld [vmem:[%s3 + $0x68] sm:$0xff]
    %v211 = vld [vmem:[%s3 + $0x70] sm:$0xff]
    %v212 = vld [vmem:[%s3 + $0x78] sm:$0xff]
    %v213 = vld [vmem:[%s4] sm:$0x1]
    %v215 = vperm.slane %v213, 0
    %217 = vmatpush.msra.mxu0 %v212
    %218 = vmatpush.msra.mxu0 %v211
    %219 = vmatpush.msra.mxu0 %v210
    %220 = vmatpush.msra.mxu0 %v209
    %221 = vmatpush.msra.mxu0 %v208
    %222 = vmatpush.msra.mxu0 %v207
    %223 = vmatpush.msra.mxu0 %v206
    %224 = vmatpush.msra.mxu0 %v205
    %225 = vmatpush.msra.mxu0 %v204
    %226 = vmatpush.msra.mxu0 %v203
    %227 = vmatpush.msra.mxu0 %v202
    %228 = vmatpush.msra.mxu0 %v201
    %229 = vmatpush.msra.mxu0 %v200
    %230 = vmatpush.msra.mxu0 %v199
    %231 = vmatpush.msra.mxu0 %v198
    %232 = vmatpush.msra.mxu0 %v197
    %233 = vmatmul.f32.gmra.mxu0 %v196
    %v234 = vpop.f32.mrf.mxu0
    %v235 = vadd.f32 %v215, %v234
    %236 = vdwg.mxu0
    %vm237 = vcmask 228352
    %238 = vst.msk [vmem:[#allocation5] sm:$0xff] %vm237, %v235
    // Predicated region
    $region26: #{tpu_custom_call.1} parent=1 // pred_check
      _
    $region27: #{tpu_custom_call.1} parent=1 // pred_check_branch
      %240 = sbr.rel (0) target = $region29
    $region28: #{tpu_custom_call.1} parent=1 // pred_region
      %242 = vsyncadd [#allocation4], 0
      %s244 = sshll.u32 [#allocation5], 4
      %s245 = int_to_ptr.vmem [resolvable:$true] %s244
      %s246 = sshll.u32 %s5, 4
      %s247 = int_to_ptr.hbm [resolvable:$true] %s246
      %249 = dma.vmem_to_hbm [thread:$0]  %s245, 128, %s247, [#allocation4]
    $region29: #{tpu_custom_call.1} parent=1 // pred_fallthru
      _
    // Predicated region
    $region30: #{tpu_custom_call.1} parent=1 // pred_check
      _
    $region31: #{tpu_custom_call.1} parent=1 // pred_check_branch
      %251 = sbr.rel (0) target = $region33
    $region32: #{tpu_custom_call.1} parent=1 // pred_region
      %253 = dma.done [#allocation4], 128
    $region33: #{tpu_custom_call.1} parent=1 // pred_fallthru
      _
    %254 = vsyncpa [#allocation3], 1
    %255 = vsyncpa [#allocation4], 1

</llo_original>
